<compile_context>
chip_gen: v7x
topology: tpu7x:2x2x1
jax: 0.10.0
libtpu: 0.0.40
codegen_flags: <defaults>
</compile_context>

<pallas_src>
import functools

import jax
import jax.numpy as jnp
from jax import lax
from jax.experimental import pallas as pl
from jax.experimental.pallas import tpu as pltpu

LANES = 128


def _round_up(x: int, m: int) -> int:
    return ((x + m - 1) // m) * m


def _device_tuning() -> tuple[int, int]:
    """(core_split, target_tile_bytes) for the current default TPU."""
    try:
        kind = jax.devices()[0].device_kind.lower()
    except Exception:
        kind = ""
    if "v7" in kind:
        # 2 TensorCores/chip, ~3.2 TB/s HBM per TC: split rows across TCs and use
        # the largest tiles (2 x 4 MiB double-buffered, well under 32 MiB scoped VMEM).
        return 2, 4 * 1024 * 1024
    # v5e / v6e: single TensorCore -> no core split (it was pure overhead).
    return 1, 2 * 1024 * 1024


def _nll_sum_kernel(x_ref, acc_ref, *, tile_rows, chunk_rows, rows_total,
                    tiles_per_core):
    """Accumulate the (masked) sum of one row-tile into a vreg-shaped accumulator.

    x_ref  : (tile_rows, 128) VMEM tile in the input's native dtype.
    acc_ref: (8, 128) f32 output block for this core slice; its block index only
             depends on the parallel axis, so it stays VMEM-resident across the
             inner "arbitrary" axis and doubles as the accumulator.
    """
    c = pl.program_id(0)   # core-split index ("parallel")
    i = pl.program_id(1)   # tile index within this core slice ("arbitrary")

    @pl.when(i == 0)
    def _init():  # must run even for phantom tiles so the output block is defined
        acc_ref[...] = jnp.zeros_like(acc_ref)

    global_tile = c * tiles_per_core + i
    base_row = global_tile * tile_rows
    is_live = base_row < rows_total                   # phantom tile -> skip all compute
    is_interior = base_row + tile_rows <= rows_total  # no row masking needed
    num_chunks = tile_rows // chunk_rows

    @pl.when(jnp.logical_and(is_live, is_interior))
    def _interior():
        # Chunked accumulation bounds the upcast-f32 live range to ~32 vregs
        # (no spills at MiB-scale tiles); vld stays the only busy slot.
        def body(j, acc):
            r = pl.multiple_of(j * chunk_rows, chunk_rows)
            x = x_ref[pl.ds(r, chunk_rows), :].astype(jnp.float32)
            return acc + x.reshape(-1, 8, LANES).sum(axis=0)

        acc_ref[...] += lax.fori_loop(
            0, num_chunks, body, jnp.zeros((8, LANES), jnp.float32), unroll=True)

    @pl.when(jnp.logical_and(is_live, jnp.logical_not(is_interior)))
    def _tail():
        # Boundary tile: rows past rows_total read uninitialized VMEM; mask them
        # to zero with jnp.where AFTER the cast (NaN/Inf-safe).  Do not replace
        # the select with a multiply-by-zero.
        def body(j, acc):
            r = pl.multiple_of(j * chunk_rows, chunk_rows)
            x = x_ref[pl.ds(r, chunk_rows), :].astype(jnp.float32)
            row_ids = base_row + r + lax.broadcasted_iota(jnp.int32, x.shape, 0)
            x = jnp.where(row_ids < rows_total, x, 0.0)
            return acc + x.reshape(-1, 8, LANES).sum(axis=0)

        acc_ref[...] += lax.fori_loop(
            0, num_chunks, body, jnp.zeros((8, LANES), jnp.float32), unroll=True)


def nll_loss(prob: jax.Array) -> jax.Array:
    """Pallas equivalent of NLLLoss.forward: returns -sum(prob) as a 0-d scalar."""
    n = int(prob.size)
    out_dtype = prob.dtype if jnp.issubdtype(prob.dtype, jnp.floating) else jnp.float32
    if n == 0:
        return jnp.zeros((), dtype=out_dtype)

    core_split, target_bytes = _device_tuning()

    itemsize = jnp.dtype(prob.dtype).itemsize
    sublane = max(8, 32 // max(1, itemsize))  # 8 (f32) / 16 (bf16) / 32 (8-bit)

    flat = prob.reshape(-1)  # row-major flatten: free (layout-preserving)
    if n % LANES != 0:
        # Cold path: zero lane-pad (sum-neutral).  Costs one extra HBM pass; kept
        # simple because unaligned sizes are rare for this loss.
        flat = jnp.pad(flat, (0, _round_up(n, LANES) - n))
    rows = flat.shape[0] // LANES
    x2d = flat.reshape(rows, LANES)  # free reshape, native dtype (no wrapper astype)

    # Dtype-aware, byte-targeted tiling: constant-bytes tiles keep per-step DMA
    # time above the fixed grid-step overhead for every dtype.
    rows_padded = _round_up(rows, sublane)
    tile_rows_target = max(sublane, target_bytes // (LANES * itemsize))
    chunk_rows = max(sublane, min(256, rows_padded, tile_rows_target))
    chunk_rows = _round_up(chunk_rows, sublane)
    tile_rows = min(tile_rows_target, _round_up(rows_padded, chunk_rows))
    assert tile_rows % chunk_rows == 0 and chunk_rows % 8 == 0

    num_tiles = pl.cdiv(rows, tile_rows)
    tiles_per_core = pl.cdiv(num_tiles, core_split)
    last_block = num_tiles - 1

    kernel = functools.partial(
        _nll_sum_kernel,
        tile_rows=tile_rows,
        chunk_rows=chunk_rows,
        rows_total=rows,
        tiles_per_core=tiles_per_core,
    )

    partials = pl.pallas_call(
        kernel,
        out_shape=jax.ShapeDtypeStruct((core_split * 8, LANES), jnp.float32),
        grid=(core_split, tiles_per_core),
        in_specs=[
            pl.BlockSpec(
                (tile_rows, LANES),
                # Clamp phantom tiles (core-split remainder) onto the last real
                # block; the kernel skips their compute and the repeated block
                # index lets the pipeline elide the re-DMA.
                lambda c, i: (jnp.minimum(c * tiles_per_core + i, last_block), 0),
                # TODO(synk): sweep pipeline_mode=pl.Buffered(3) on hardware; kept
                # at the default depth of 2 here.
            )
        ],
        out_specs=pl.BlockSpec((8, LANES), lambda c, i: (c, 0)),
        compiler_params=pltpu.CompilerParams(
            dimension_semantics=("parallel", "arbitrary"),
        ),
        cost_estimate=pl.CostEstimate(
            flops=n,
            transcendentals=0,
            bytes_accessed=n * itemsize + core_split * 8 * LANES * 4,
        ),
    )(x2d)

    loss = -jnp.sum(partials)  # tiny lane-dense f32 reduce + negate in the wrapper
    return loss.astype(out_dtype)


if __name__ == "__main__":
    key = jax.random.PRNGKey(0)
    k0, k1, k2, k3 = jax.random.split(key, 4)

    # Primary check: small NCHW-like "prob" tensor (single interior tile).
    prob = jax.random.uniform(k0, (2, 4, 16, 16), dtype=jnp.float32)
    loss = nll_loss(prob)
    jax.block_until_ready(loss)
    ref = -jnp.sum(prob)
    assert jnp.allclose(loss, ref, rtol=1e-5, atol=1e-5), (loss, ref)

    # Odd size (399 elems): exercises lane-pad fallback + masked tail path.
    p2 = jax.random.uniform(k1, (3, 7, 19), dtype=jnp.float32)
    l2 = nll_loss(p2)
    jax.block_until_ready(l2)
    assert jnp.allclose(l2, -jnp.sum(p2), rtol=1e-5, atol=1e-5), (l2, -jnp.sum(p2))

    # Larger input (1024 rows): exercises the chunked interior-tile reduction.
    p3 = jax.random.uniform(k2, (8, 64, 256), dtype=jnp.float32)
    l3 = nll_loss(p3)
    jax.block_until_ready(l3)
    ref3 = -jnp.sum(p3)
    assert jnp.allclose(l3, ref3, rtol=1e-4, atol=1e-2), (l3, ref3)

    # bf16 input: exercises the dtype-aware (byte-targeted) tiling path.
    p4 = jax.random.uniform(k3, (4, 128, 128), dtype=jnp.float32).astype(jnp.bfloat16)
    l4 = nll_loss(p4)
    jax.block_until_ready(l4)
    ref4 = (-jnp.sum(p4.astype(jnp.float32))).astype(jnp.bfloat16)
    assert jnp.allclose(l4.astype(jnp.float32), ref4.astype(jnp.float32),
                        rtol=2e-2, atol=2e-2), (l4, ref4)

    print("KERNEL_OK")
</pallas_src>

<mosaic_0001>
module attributes {stable_mosaic.version = 11 : i64} {
  func.func @_nll_sum_kernel(%arg0: i32, %arg1: i32, %arg2: memref<16x128xf32, #tpu.memory_space<vmem>>, %arg3: memref<8x128xf32, #tpu.memory_space<vmem>>) attributes {dimension_semantics = [#tpu.dimension_semantics<parallel>, #tpu.dimension_semantics<arbitrary>], iteration_bounds = array<i64: 1, 1>, scalar_prefetch = 0 : i64, scratch_operands = 0 : i64, tpu.core_type = #tpu.core_type<tc>, window_params = [{transform_indices = @transform_0, window_bounds = array<i64: 16, 128>}, {transform_indices = @transform_1, window_bounds = array<i64: 8, 128>}]} {
    %c0_i32 = arith.constant 0 : i32
    %0 = arith.cmpi eq, %arg1, %c0_i32 : i32
    %1 = arith.extui %0 : i1 to i32
    %c0_i32_0 = arith.constant 0 : i32
    %2 = arith.cmpi ne, %1, %c0_i32_0 : i32
    scf.if %2 {
      %cst = arith.constant 0.000000e+00 : f32
      %16 = vector.broadcast %cst : f32 to vector<8x128xf32>
      %c0 = arith.constant 0 : index
      %c0_6 = arith.constant 0 : index
      %17 = vector.load %arg3[%c0, %c0_6] : memref<8x128xf32, #tpu.memory_space<vmem>>, vector<8x128xf32>
      tpu.vector_store %arg3[%c0, %c0_6], %16 {strides = array<i32>} : memref<8x128xf32, #tpu.memory_space<vmem>>, vector<8x128xf32>,
    } else {
    }
    %c1_i32 = arith.constant 1 : i32
    %3 = arith.muli %arg0, %c1_i32 : i32
    %4 = arith.addi %3, %arg1 : i32
    %c16_i32 = arith.constant 16 : i32
    %5 = arith.muli %4, %c16_i32 : i32
    %c16_i32_1 = arith.constant 16 : i32
    %6 = arith.cmpi slt, %5, %c16_i32_1 : i32
    %c16_i32_2 = arith.constant 16 : i32
    %7 = arith.addi %5, %c16_i32_2 : i32
    %c16_i32_3 = arith.constant 16 : i32
    %8 = arith.cmpi sle, %7, %c16_i32_3 : i32
    %9 = arith.andi %6, %8 : i1
    %10 = arith.extui %9 : i1 to i32
    %c0_i32_4 = arith.constant 0 : i32
    %11 = arith.cmpi ne, %10, %c0_i32_4 : i32
    scf.if %11 {
      %c0 = arith.constant 0 : index
      %c0_6 = arith.constant 0 : index
      %16 = vector.load %arg3[%c0, %c0_6] : memref<8x128xf32, #tpu.memory_space<vmem>>, vector<8x128xf32>
      %cst = arith.constant 0.000000e+00 : f32
      %17 = vector.broadcast %cst : f32 to vector<8x128xf32>
      %c0_i32_7 = arith.constant 0 : i32
      %c16_i32_8 = arith.constant 16 : i32
      %18 = arith.muli %c0_i32_7, %c16_i32_8 : i32
      %19 = tpu.assume_multiple %18, 16 : i32
      %20 = arith.index_cast %19 : i32 to index
      %c0_9 = arith.constant 0 : index
      %21 = vector.load %arg2[%20, %c0_9] : memref<16x128xf32, #tpu.memory_space<vmem>>, vector<16x128xf32>
      %22 = vector.shape_cast %21 : vector<16x128xf32> to vector<2x8x128xf32>
      %cst_10 = arith.constant dense<0.000000e+00> : vector<8x128xf32>
      %23 = vector.multi_reduction <add>, %22, %cst_10 [0] : vector<2x8x128xf32> to vector<8x128xf32>
      %24 = arith.addf %17, %23 : vector<8x128xf32>
      %c1_i32_11 = arith.constant 1 : i32
      %25 = arith.addf %16, %24 : vector<8x128xf32>
      %c0_12 = arith.constant 0 : index
      %c0_13 = arith.constant 0 : index
      %26 = vector.load %arg3[%c0_12, %c0_13] : memref<8x128xf32, #tpu.memory_space<vmem>>, vector<8x128xf32>
      tpu.vector_store %arg3[%c0_12, %c0_13], %25 {strides = array<i32>} : memref<8x128xf32, #tpu.memory_space<vmem>>, vector<8x128xf32>,
    } else {
    }
    %true = arith.constant true
    %12 = arith.xori %8, %true : i1
    %13 = arith.andi %6, %12 : i1
    %14 = arith.extui %13 : i1 to i32
    %c0_i32_5 = arith.constant 0 : i32
    %15 = arith.cmpi ne, %14, %c0_i32_5 : i32
    scf.if %15 {
      %c0 = arith.constant 0 : index
      %c0_6 = arith.constant 0 : index
      %16 = vector.load %arg3[%c0, %c0_6] : memref<8x128xf32, #tpu.memory_space<vmem>>, vector<8x128xf32>
      %cst = arith.constant 0.000000e+00 : f32
      %17 = vector.broadcast %cst : f32 to vector<8x128xf32>
      %c0_i32_7 = arith.constant 0 : i32
      %c16_i32_8 = arith.constant 16 : i32
      %18 = arith.muli %c0_i32_7, %c16_i32_8 : i32
      %19 = tpu.assume_multiple %18, 16 : i32
      %20 = arith.index_cast %19 : i32 to index
      %c0_9 = arith.constant 0 : index
      %21 = vector.load %arg2[%20, %c0_9] : memref<16x128xf32, #tpu.memory_space<vmem>>, vector<16x128xf32>
      %22 = arith.addi %5, %19 : i32
      %23 = tpu.iota {dimensions = array<i32: 0>} : vector<16x128xi32>
      %24 = vector.broadcast %22 : i32 to vector<16x128xi32>
      %25 = arith.addi %24, %23 : vector<16x128xi32>
      %c16_i32_10 = arith.constant 16 : i32
      %26 = vector.broadcast %c16_i32_10 : i32 to vector<16x128xi32>
      %27 = arith.cmpi slt, %25, %26 : vector<16x128xi32>
      %cst_11 = arith.constant 0.000000e+00 : f32
      %28 = vector.broadcast %cst_11 : f32 to vector<16x128xf32>
      %29 = arith.select %27, %21, %28 : vector<16x128xi1>, vector<16x128xf32>
      %30 = vector.shape_cast %29 : vector<16x128xf32> to vector<2x8x128xf32>
      %cst_12 = arith.constant dense<0.000000e+00> : vector<8x128xf32>
      %31 = vector.multi_reduction <add>, %30, %cst_12 [0] : vector<2x8x128xf32> to vector<8x128xf32>
      %32 = arith.addf %17, %31 : vector<8x128xf32>
      %c1_i32_13 = arith.constant 1 : i32
      %33 = arith.addf %16, %32 : vector<8x128xf32>
      %c0_14 = arith.constant 0 : index
      %c0_15 = arith.constant 0 : index
      %34 = vector.load %arg3[%c0_14, %c0_15] : memref<8x128xf32, #tpu.memory_space<vmem>>, vector<8x128xf32>
      tpu.vector_store %arg3[%c0_14, %c0_15], %33 {strides = array<i32>} : memref<8x128xf32, #tpu.memory_space<vmem>>, vector<8x128xf32>,
    } else {
    }
    return
  }
  func.func @transform_0(%arg0: i32, %arg1: i32) -> (i32, i32) {
    %c1_i32 = arith.constant 1 : i32
    %0 = arith.muli %arg0, %c1_i32 : i32
    %1 = arith.addi %0, %arg1 : i32
    %c0_i32 = arith.constant 0 : i32
    %2 = arith.minsi %1, %c0_i32 : i32
    %c0_i32_0 = arith.constant 0 : i32
    %c0_i32_1 = arith.constant 0 : i32
    return %2, %c0_i32_0 : i32, i32
  }
  func.func @transform_1(%arg0: i32, %arg1: i32) -> (i32, i32) {
    %c0_i32 = arith.constant 0 : i32
    %c0_i32_0 = arith.constant 0 : i32
    return %arg0, %c0_i32 : i32, i32
  }
}

</mosaic_0001>

<llo_original>
// kernel: tpu_custom_call.1
$region0: #{tpu_custom_call.1}
  #allocation0 [shape = 'u32[]', space=smem, size = 0x4, offset = 0x4, fixed_abs, tag = 'smem constant byte address 0x4 - core index']
  #allocation1 [shape = 'u32[144,128]{1,0:T(1,128)}', space=vmem, size = 0x12000, scoped, tag = 'internal scratch']
  %s0 = inlined_call_operand.hbm [shape: f32[16,128], index: 0, kind: input, shape index: {}]
  %s1 = inlined_call_operand.hbm [shape: f32[8,128], index: 1, kind: output, shape index: {}]
  %s2 = sld [smem:[#allocation0]]
  $region30: #{tpu_custom_call.1} parent=0
    _
  %s4 = ssub.s32 1, %s2
  %s5 = scalar_select 0, %s4, %s2
  $region1: #{tpu_custom_call.1} parent=0
    #allocation2 [shape = 'u8[8192]{0}', space=vmem, size = 0x2000, scoped, tag = 'input window, operand 0, single buffered']
    #allocation3 [shape = 's32[1]{0}', space=sflag, size = 0x4, scoped, tag = 'scoped memory for tpu_custom_call.1']
    #allocation4 [shape = 's32[1]{0}', space=sflag, size = 0x4, scoped, tag = 'scoped memory for tpu_custom_call.1']
    #allocation5 [shape = 'u8[4096]{0}', space=vmem, size = 0x1000, scoped, tag = 'output window, operand 0, single buffered']
    %6 = vsyncpa [#allocation3], 0
    %7 = vsyncpa [#allocation4], 0
    // Predicated region
    $region2: #{tpu_custom_call.1} parent=1 // pred_check
      _
    $region3: #{tpu_custom_call.1} parent=1 // pred_check_branch
      %9 = sbr.rel (0) target = $region5
    $region4: #{tpu_custom_call.1} parent=1 // pred_region
      %s10 = sadd.s32 0, 0
      %p11 = scmp.lt.s32.totalorder %s10, 0
      %s12 = scalar_select %p11, %s10, 0
      %s13 = smul.u32 2, %s12
      %s15 = ssub.s32 256, 256
      %16 = vsyncadd [#allocation3], %s15
      %s17 = smul.addr %s13, 128
      %s18 = scalar_lea.hbm %s0, %s17
      %s19 = sshll.u32 [#allocation2], 4
      %s20 = int_to_ptr.vmem [resolvable:$true] %s19
      %25 = dma.hbm_to_vmem [thread:$0]  %s18, 256, %s20, [#allocation3], 128, 128, 8
    $region5: #{tpu_custom_call.1} parent=1 // pred_fallthru
      _
    // Predicated region
    $region6: #{tpu_custom_call.1} parent=1 // pred_check
      _
    $region7: #{tpu_custom_call.1} parent=1 // pred_check_branch
      %27 = sbr.rel (0) target = $region9
    $region8: #{tpu_custom_call.1} parent=1 // pred_region
      %28 = dma.done [#allocation3], 256
    $region9: #{tpu_custom_call.1} parent=1 // pred_fallthru
      _
    %s29 = sadd.s32 0, 0
    %p30 = scmp.lt.s32.totalorder %s29, 0
    %s31 = scalar_select %p30, %s29, 0
    %s32 = smul.u32 2, %s31
    %p33 = scmp.eq.s32.totalorder 0, 0
    // Predicated region
    $region10: #{tpu_custom_call.1} parent=1 // pred_check
      %p34 = pneg %p33
    $region11: #{tpu_custom_call.1} parent=1 // pred_check_branch
      %36 = sbr.rel (%p34) target = $region13
    $region12: #{tpu_custom_call.1} parent=1 // pred_region
      %37 = vst [vmem:[#allocation5] sm:$0xff] 0.0
    $region13: #{tpu_custom_call.1} parent=1 // pred_fallthru
      _
    %s38 = sadd.s32 0, 0
    %s39 = smul.u32 %s38, 16
    %p40 = scmp.lt.s32.totalorder %s39, 16
    %s41 = sadd.s32 %s39, 16
    %p42 = scmp.le.s32.totalorder %s41, 16
    %p43 = pnand %p40, %p42
    %p44 = pneg %p43
    // Predicated region
    $region14: #{tpu_custom_call.1} parent=1 // pred_check
      _
    $region15: #{tpu_custom_call.1} parent=1 // pred_check_branch
      %46 = sbr.rel (%p43) target = $region17
    $region16: #{tpu_custom_call.1} parent=1 // pred_region
      %v47 = vld [vmem:[#allocation5] sm:$0xff]
      %v48 = vld [vmem:[#allocation2] sm:$0xff]
      %v49 = vld [vmem:[#allocation2 + $0x8] sm:$0xff]
      %v50 = vadd.f32 %v48, %v49
      %v51 = vadd.f32 %v50, 0.0
      %v52 = vadd.f32 %v47, %v51
      %53 = vst [vmem:[#allocation5] sm:$0xff] %v52
    $region17: #{tpu_custom_call.1} parent=1 // pred_fallthru
      _
    %p54 = scmp.gt.s32.totalorder %s41, 16
    %p55 = pnand %p40, %p54
    %p56 = pneg %p55
    // Predicated region
    $region18: #{tpu_custom_call.1} parent=1 // pred_check
      _
    $region19: #{tpu_custom_call.1} parent=1 // pred_check_branch
      %58 = sbr.rel (%p55) target = $region21
    $region20: #{tpu_custom_call.1} parent=1 // pred_region
      %v59 = vld [vmem:[#allocation5] sm:$0xff]
      %v60 = vld [vmem:[#allocation2] sm:$0xff]
      %v61 = vld [vmem:[#allocation2 + $0x8] sm:$0xff]
      %s62 = sadd.s32 %s39, 0
      %v63 = vlaneseq
      %v64 = vshrl.u32 %v63, 7
      %v65 = vadd.s32 %v64, 8
      %v66 = vstv %s62
      %v67 = vadd.s32 %v66, %v64
      %v68 = vadd.s32 %v66, %v65
      %vm69 = vcmp.lt.s32.totalorder %v67, 16
      %vm70 = vcmp.lt.s32.totalorder %v68, 16
      %v71 = vsel %vm69, %v60, 0.0
      %v72 = vsel %vm70, %v61, 0.0
      %v73 = vadd.f32 %v71, %v72
      %v74 = vadd.f32 %v73, 0.0
      %v75 = vadd.f32 %v59, %v74
      %76 = vst [vmem:[#allocation5] sm:$0xff] %v75
    $region21: #{tpu_custom_call.1} parent=1 // pred_fallthru
      _
    // Predicated region
    $region22: #{tpu_custom_call.1} parent=1 // pred_check
      _
    $region23: #{tpu_custom_call.1} parent=1 // pred_check_branch
      %78 = sbr.rel (0) target = $region25
    $region24: #{tpu_custom_call.1} parent=1 // pred_region
      %s80 = ssub.s32 128, 128
      %81 = vsyncadd [#allocation4], %s80
      %s83 = sshll.u32 [#allocation5], 4
      %s84 = int_to_ptr.vmem [resolvable:$true] %s83
      %86 = dma.vmem_to_hbm [thread:$0]  %s84, 128, %s1, [#allocation4]
    $region25: #{tpu_custom_call.1} parent=1 // pred_fallthru
      _
    // Predicated region
    $region26: #{tpu_custom_call.1} parent=1 // pred_check
      _
    $region27: #{tpu_custom_call.1} parent=1 // pred_check_branch
      %88 = sbr.rel (0) target = $region29
    $region28: #{tpu_custom_call.1} parent=1 // pred_region
      %89 = dma.done [#allocation4], 128
    $region29: #{tpu_custom_call.1} parent=1 // pred_fallthru
      _
    %90 = vsyncpa [#allocation3], 1
    %91 = vsyncpa [#allocation4], 1

</llo_original>
